<compile_context>
chip_gen: v7x
topology: tpu7x:2x2x1
jax: 0.10.0
libtpu: 0.0.40
codegen_flags: <defaults>
</compile_context>

<pallas_src>
import functools

import jax
import jax.numpy as jnp
from jax.experimental import pallas as pl
from jax.experimental.pallas import tpu as pltpu


def _round_up(v: int, m: int) -> int:
    return (v + m - 1) // m * m


def _groupwise_hinge_kernel(x_ref, out_ref, *, sample_indices, dilation, margin,
                            num_groups, block_g):
    # x_ref:   (E, BG) tile of the transposed logits — groups along the 128-lane axis.
    # out_ref: (1, 1, BG) per-block partial sums (lane-dense, one row per grid step).
    i = pl.program_id(0)

    # Widen in-register (no-op if the input is already f32; keeps bf16 cheap in HBM),
    # then sigmoid once over the whole tile (EUP).
    s = jax.nn.sigmoid(x_ref[...].astype(jnp.float32))          # (E, BG)

    # Static unroll over the (pos, neg) pairs: each iteration is a full-width VPU
    # subtract + relu + add on (1, BG) vregs. No cross-lane work in the loop.
    acc = jnp.zeros((1, block_g), jnp.float32)
    for idx in sample_indices:
        pos = s[idx:idx + 1, :]                                  # (1, BG)
        neg = s[idx + dilation:idx + dilation + 1, :]            # (1, BG)
        acc = acc + jnp.maximum(jnp.float32(margin) - (pos - neg), 0.0)

    # Mask out padded group columns (tail of the last block).
    col = jax.lax.broadcasted_iota(jnp.int32, (1, block_g), 1) + i * block_g
    acc = jnp.where(col < num_groups, acc, 0.0)

    out_ref[0, :, :] = acc


def groupwise_hinge_loss_v1(logits, labels=None, *, examples_per_group=8, margin=1.0,
                            stride=1, dilation=1, block_g=16384):
    """Pallas implementation of GroupwiseHingeLossV1.forward (reduction='mean')."""
    del labels  # the module never uses labels; the ranking target is implicitly +1
    E = examples_per_group
    x = logits.reshape(-1, E)                    # (G, E) — keep the input dtype as-is
    G = x.shape[0]
    sample_indices = tuple(range(0, E - dilation, stride))
    assert len(sample_indices) > 0, "need at least one (pos, neg) pair"

    # Lane-dense layout: make the group axis the last (128-lane) dimension.
    xt = x.T                                     # (E, G) — layout plumbing in XLA

    # Tile G into lane-dense blocks; balance block size against block count so the
    # padding waste stays small, and handle arbitrary G via padding + in-kernel masking.
    num_blocks = pl.cdiv(G, block_g)
    bg = _round_up(pl.cdiv(G, num_blocks), 128)
    g_padded = num_blocks * bg
    if g_padded != G:
        xt = jnp.pad(xt, ((0, 0), (0, g_padded - G)))

    kernel = functools.partial(
        _groupwise_hinge_kernel,
        sample_indices=sample_indices,
        dilation=dilation,
        margin=float(margin),
        num_groups=G,
        block_g=bg,
    )

    partials = pl.pallas_call(
        kernel,
        out_shape=jax.ShapeDtypeStruct((num_blocks, 1, bg), jnp.float32),
        grid=(num_blocks,),
        in_specs=[pl.BlockSpec((E, bg), lambda i: (0, i))],
        out_specs=pl.BlockSpec((1, 1, bg), lambda i: (i, 0, 0)),
        compiler_params=pltpu.CompilerParams(dimension_semantics=("parallel",)),
    )(xt)

    # Final tree reduction + hoisted 1/(num_pairs * G) scale, done once outside the kernel.
    scale = 1.0 / (len(sample_indices) * G)
    return jnp.sum(partials) * jnp.float32(scale)


def _reference_loss(logits, examples_per_group, margin, stride, dilation):
    # Pure-JAX mirror of the PyTorch forward (MarginRankingLoss with target=+1).
    s = jax.nn.sigmoid(logits.astype(jnp.float32)).reshape(-1, examples_per_group)
    idxs = list(range(0, examples_per_group - dilation, stride))
    loss = jnp.float32(0.0)
    for idx in idxs:
        pos = s[:, idx]
        neg = s[:, idx + dilation]
        loss = loss + jnp.mean(jnp.maximum(margin - (pos - neg), 0.0))
    return loss / len(idxs)


if __name__ == "__main__":
    key = jax.random.PRNGKey(0)

    # Small deterministic test cases:
    #   1) G not a multiple of 128 -> exercises tail masking, single block
    #   2) stride/dilation != 1     -> exercises the general pair indexing
    #   3) small block_g override   -> exercises the multi-block "parallel" path
    cases = [
        dict(num_groups=48, examples_per_group=8, margin=1.0, stride=1, dilation=1, block_g=16384),
        dict(num_groups=300, examples_per_group=8, margin=0.5, stride=2, dilation=2, block_g=16384),
        dict(num_groups=300, examples_per_group=8, margin=1.0, stride=1, dilation=1, block_g=128),
    ]

    for case_i, cfg in enumerate(cases):
        key, k_logits, k_labels = jax.random.split(key, 3)
        n = cfg["num_groups"] * cfg["examples_per_group"]
        # flat reranker scores, G * E of them
        logits = jax.random.normal(k_logits, (n,), dtype=jnp.float32)
        # labels are part of the forward signature but unused by the module's math
        labels = jax.random.bernoulli(k_labels, 0.5, (n,)).astype(jnp.float32)

        loss = groupwise_hinge_loss_v1(
            logits, labels,
            examples_per_group=cfg["examples_per_group"],
            margin=cfg["margin"],
            stride=cfg["stride"],
            dilation=cfg["dilation"],
            block_g=cfg["block_g"],
        )
        loss = jax.block_until_ready(loss)

        ref = _reference_loss(logits, cfg["examples_per_group"], cfg["margin"],
                              cfg["stride"], cfg["dilation"])
        assert jnp.allclose(loss, ref, rtol=1e-5, atol=1e-6), (case_i, loss, ref)

    print("KERNEL_OK")
</pallas_src>

<mosaic_0001>
module attributes {stable_mosaic.version = 11 : i64} {
  func.func @_groupwise_hinge_kernel(%arg0: i32, %arg1: memref<8x128xf32, #tpu.memory_space<vmem>>, %arg2: memref<1x1x128xf32, #tpu.memory_space<vmem>>) attributes {dimension_semantics = [#tpu.dimension_semantics<parallel>], iteration_bounds = array<i64: 1>, scalar_prefetch = 0 : i64, scratch_operands = 0 : i64, tpu.core_type = #tpu.core_type<tc>, window_params = [{transform_indices = @transform_0, window_bounds = array<i64: 8, 128>}, {transform_indices = @transform_1, window_bounds = array<i64: 1, 1, 128>}]} {
    %c0 = arith.constant 0 : index
    %c0_0 = arith.constant 0 : index
    %0 = vector.load %arg1[%c0, %c0_0] : memref<8x128xf32, #tpu.memory_space<vmem>>, vector<8x128xf32>
    %1 = arith.negf %0 : vector<8x128xf32>
    %2 = math.exp %1 : vector<8x128xf32>
    %cst = arith.constant 1.000000e+00 : f32
    %3 = vector.broadcast %cst : f32 to vector<8x128xf32>
    %4 = arith.addf %3, %2 : vector<8x128xf32>
    %5 = arith.divf %3, %4 : vector<8x128xf32>
    %cst_1 = arith.constant 0.000000e+00 : f32
    %6 = vector.broadcast %cst_1 : f32 to vector<1x128xf32>
    %7 = vector.extract_strided_slice %5 {offsets = [0, 0], sizes = [1, 128], strides = [1, 1]} : vector<8x128xf32> to vector<1x128xf32>
    %8 = vector.extract_strided_slice %5 {offsets = [1, 0], sizes = [1, 128], strides = [1, 1]} : vector<8x128xf32> to vector<1x128xf32>
    %9 = arith.subf %7, %8 : vector<1x128xf32>
    %cst_2 = arith.constant 1.000000e+00 : f32
    %10 = vector.broadcast %cst_2 : f32 to vector<1x128xf32>
    %11 = arith.subf %10, %9 : vector<1x128xf32>
    %cst_3 = arith.constant 0.000000e+00 : f32
    %12 = vector.broadcast %cst_3 : f32 to vector<1x128xf32>
    %13 = arith.maximumf %11, %12 : vector<1x128xf32>
    %14 = arith.addf %6, %13 : vector<1x128xf32>
    %15 = vector.extract_strided_slice %5 {offsets = [1, 0], sizes = [1, 128], strides = [1, 1]} : vector<8x128xf32> to vector<1x128xf32>
    %16 = vector.extract_strided_slice %5 {offsets = [2, 0], sizes = [1, 128], strides = [1, 1]} : vector<8x128xf32> to vector<1x128xf32>
    %17 = arith.subf %15, %16 : vector<1x128xf32>
    %cst_4 = arith.constant 1.000000e+00 : f32
    %18 = vector.broadcast %cst_4 : f32 to vector<1x128xf32>
    %19 = arith.subf %18, %17 : vector<1x128xf32>
    %cst_5 = arith.constant 0.000000e+00 : f32
    %20 = vector.broadcast %cst_5 : f32 to vector<1x128xf32>
    %21 = arith.maximumf %19, %20 : vector<1x128xf32>
    %22 = arith.addf %14, %21 : vector<1x128xf32>
    %23 = vector.extract_strided_slice %5 {offsets = [2, 0], sizes = [1, 128], strides = [1, 1]} : vector<8x128xf32> to vector<1x128xf32>
    %24 = vector.extract_strided_slice %5 {offsets = [3, 0], sizes = [1, 128], strides = [1, 1]} : vector<8x128xf32> to vector<1x128xf32>
    %25 = arith.subf %23, %24 : vector<1x128xf32>
    %cst_6 = arith.constant 1.000000e+00 : f32
    %26 = vector.broadcast %cst_6 : f32 to vector<1x128xf32>
    %27 = arith.subf %26, %25 : vector<1x128xf32>
    %cst_7 = arith.constant 0.000000e+00 : f32
    %28 = vector.broadcast %cst_7 : f32 to vector<1x128xf32>
    %29 = arith.maximumf %27, %28 : vector<1x128xf32>
    %30 = arith.addf %22, %29 : vector<1x128xf32>
    %31 = vector.extract_strided_slice %5 {offsets = [3, 0], sizes = [1, 128], strides = [1, 1]} : vector<8x128xf32> to vector<1x128xf32>
    %32 = vector.extract_strided_slice %5 {offsets = [4, 0], sizes = [1, 128], strides = [1, 1]} : vector<8x128xf32> to vector<1x128xf32>
    %33 = arith.subf %31, %32 : vector<1x128xf32>
    %cst_8 = arith.constant 1.000000e+00 : f32
    %34 = vector.broadcast %cst_8 : f32 to vector<1x128xf32>
    %35 = arith.subf %34, %33 : vector<1x128xf32>
    %cst_9 = arith.constant 0.000000e+00 : f32
    %36 = vector.broadcast %cst_9 : f32 to vector<1x128xf32>
    %37 = arith.maximumf %35, %36 : vector<1x128xf32>
    %38 = arith.addf %30, %37 : vector<1x128xf32>
    %39 = vector.extract_strided_slice %5 {offsets = [4, 0], sizes = [1, 128], strides = [1, 1]} : vector<8x128xf32> to vector<1x128xf32>
    %40 = vector.extract_strided_slice %5 {offsets = [5, 0], sizes = [1, 128], strides = [1, 1]} : vector<8x128xf32> to vector<1x128xf32>
    %41 = arith.subf %39, %40 : vector<1x128xf32>
    %cst_10 = arith.constant 1.000000e+00 : f32
    %42 = vector.broadcast %cst_10 : f32 to vector<1x128xf32>
    %43 = arith.subf %42, %41 : vector<1x128xf32>
    %cst_11 = arith.constant 0.000000e+00 : f32
    %44 = vector.broadcast %cst_11 : f32 to vector<1x128xf32>
    %45 = arith.maximumf %43, %44 : vector<1x128xf32>
    %46 = arith.addf %38, %45 : vector<1x128xf32>
    %47 = vector.extract_strided_slice %5 {offsets = [5, 0], sizes = [1, 128], strides = [1, 1]} : vector<8x128xf32> to vector<1x128xf32>
    %48 = vector.extract_strided_slice %5 {offsets = [6, 0], sizes = [1, 128], strides = [1, 1]} : vector<8x128xf32> to vector<1x128xf32>
    %49 = arith.subf %47, %48 : vector<1x128xf32>
    %cst_12 = arith.constant 1.000000e+00 : f32
    %50 = vector.broadcast %cst_12 : f32 to vector<1x128xf32>
    %51 = arith.subf %50, %49 : vector<1x128xf32>
    %cst_13 = arith.constant 0.000000e+00 : f32
    %52 = vector.broadcast %cst_13 : f32 to vector<1x128xf32>
    %53 = arith.maximumf %51, %52 : vector<1x128xf32>
    %54 = arith.addf %46, %53 : vector<1x128xf32>
    %55 = vector.extract_strided_slice %5 {offsets = [6, 0], sizes = [1, 128], strides = [1, 1]} : vector<8x128xf32> to vector<1x128xf32>
    %56 = vector.extract_strided_slice %5 {offsets = [7, 0], sizes = [1, 128], strides = [1, 1]} : vector<8x128xf32> to vector<1x128xf32>
    %57 = arith.subf %55, %56 : vector<1x128xf32>
    %cst_14 = arith.constant 1.000000e+00 : f32
    %58 = vector.broadcast %cst_14 : f32 to vector<1x128xf32>
    %59 = arith.subf %58, %57 : vector<1x128xf32>
    %cst_15 = arith.constant 0.000000e+00 : f32
    %60 = vector.broadcast %cst_15 : f32 to vector<1x128xf32>
    %61 = arith.maximumf %59, %60 : vector<1x128xf32>
    %62 = arith.addf %54, %61 : vector<1x128xf32>
    %63 = tpu.iota {dimensions = array<i32: 1>} : vector<1x128xi32>
    %c128_i32 = arith.constant 128 : i32
    %64 = arith.muli %arg0, %c128_i32 : i32
    %65 = vector.broadcast %64 : i32 to vector<1x128xi32>
    %66 = arith.addi %63, %65 : vector<1x128xi32>
    %c48_i32 = arith.constant 48 : i32
    %67 = vector.broadcast %c48_i32 : i32 to vector<1x128xi32>
    %68 = arith.cmpi slt, %66, %67 : vector<1x128xi32>
    %cst_16 = arith.constant 0.000000e+00 : f32
    %69 = vector.broadcast %cst_16 : f32 to vector<1x128xf32>
    %70 = arith.select %68, %62, %69 : vector<1x128xi1>, vector<1x128xf32>
    %c0_17 = arith.constant 0 : index
    %c0_18 = arith.constant 0 : index
    %c0_19 = arith.constant 0 : index
    %71 = vector.load %arg2[%c0_17, %c0_18, %c0_19] : memref<1x1x128xf32, #tpu.memory_space<vmem>>, vector<1x1x128xf32>
    %72 = vector.shape_cast %71 : vector<1x1x128xf32> to vector<1x128xf32>
    %73 = vector.shape_cast %70 : vector<1x128xf32> to vector<1x1x128xf32>
    tpu.vector_store %arg2[%c0_17, %c0_18, %c0_19], %73 {strides = array<i32>} : memref<1x1x128xf32, #tpu.memory_space<vmem>>, vector<1x1x128xf32>,
    return
  }
  func.func @transform_0(%arg0: i32) -> (i32, i32) {
    %c0_i32 = arith.constant 0 : i32
    %c0_i32_0 = arith.constant 0 : i32
    return %c0_i32, %arg0 : i32, i32
  }
  func.func @transform_1(%arg0: i32) -> (i32, i32, i32) {
    %c0_i32 = arith.constant 0 : i32
    %c0_i32_0 = arith.constant 0 : i32
    %c0_i32_1 = arith.constant 0 : i32
    return %arg0, %c0_i32, %c0_i32_0 : i32, i32, i32
  }
}

</mosaic_0001>

<llo_original>
// kernel: tpu_custom_call.1
$region0: #{tpu_custom_call.1}
  #allocation0 [shape = 'u32[]', space=smem, size = 0x4, offset = 0x4, fixed_abs, tag = 'smem constant byte address 0x4 - core index']
  #allocation1 [shape = 'u32[144,128]{1,0:T(1,128)}', space=vmem, size = 0x12000, scoped, tag = 'internal scratch']
  %s0 = inlined_call_operand.hbm [shape: f32[8,128], index: 0, kind: input, shape index: {}]
  %s1 = inlined_call_operand.hbm [shape: f32[1,1,128], index: 1, kind: output, shape index: {}]
  %s2 = sld [smem:[#allocation0]]
  $region18: #{tpu_custom_call.1} parent=0
    _
  %s4 = ssub.s32 1, %s2
  %s5 = scalar_select 0, %s4, %s2
  $region1: #{tpu_custom_call.1} parent=0
    #allocation2 [shape = 'u8[4096]{0}', space=vmem, size = 0x1000, scoped, tag = 'input window, operand 0, single buffered']
    #allocation3 [shape = 's32[1]{0}', space=sflag, size = 0x4, scoped, tag = 'scoped memory for tpu_custom_call.1']
    #allocation4 [shape = 's32[1]{0}', space=sflag, size = 0x4, scoped, tag = 'scoped memory for tpu_custom_call.1']
    #allocation5 [shape = 'u8[512]{0}', space=vmem, size = 0x400, scoped, tag = 'output window, operand 0, single buffered']
    %6 = vsyncpa [#allocation3], 0
    %7 = vsyncpa [#allocation4], 0
    // Predicated region
    $region2: #{tpu_custom_call.1} parent=1 // pred_check
      _
    $region3: #{tpu_custom_call.1} parent=1 // pred_check_branch
      %9 = sbr.rel (0) target = $region5
    $region4: #{tpu_custom_call.1} parent=1 // pred_region
      %s11 = ssub.s32 128, 128
      %12 = vsyncadd [#allocation3], %s11
      %s14 = sshll.u32 [#allocation2], 4
      %s15 = int_to_ptr.vmem [resolvable:$true] %s14
      %17 = dma.hbm_to_vmem [thread:$0]  %s0, 128, %s15, [#allocation3]
    $region5: #{tpu_custom_call.1} parent=1 // pred_fallthru
      _
    // Predicated region
    $region6: #{tpu_custom_call.1} parent=1 // pred_check
      _
    $region7: #{tpu_custom_call.1} parent=1 // pred_check_branch
      %19 = sbr.rel (0) target = $region9
    $region8: #{tpu_custom_call.1} parent=1 // pred_region
      %20 = dma.done [#allocation3], 128
    $region9: #{tpu_custom_call.1} parent=1 // pred_fallthru
      _
    %v21 = vld [vmem:[#allocation2] sm:$0xff]
    %v22 = vxor.u32 %v21, 2147483648
    %v23 = vmul.f32 %v22, 1.442695
    %v24 = vpow.pop %v23
    %v25 = vadd.f32 %v24, 1.0
    %v26 = vrcp.pop %v25
    %v27 = vmul.f32 1.0, %v26
    %v29 = vrot.slane %v27, 1
    %v31 = vsub.f32 %v27, %v29
    %v32 = vsub.f32 1.0, %v31
    %v33 = vmax.f32 %v32, 0.0
    %v34 = vadd.f32 %v33, 0.0
    %v36 = vrot.slane %v33, 1
    %v38 = vadd.f32 %v34, %v36
    %v39 = vrot.slane %v33, 2
    %v41 = vadd.f32 %v38, %v39
    %v42 = vrot.slane %v33, 3
    %v44 = vadd.f32 %v41, %v42
    %v45 = vrot.slane %v33, 4
    %v47 = vadd.f32 %v44, %v45
    %v48 = vrot.slane %v33, 5
    %v50 = vadd.f32 %v47, %v48
    %v51 = vrot.slane %v33, 6
    %v53 = vadd.f32 %v50, %v51
    %v54 = vlaneseq
    %v55 = vand.u32 %v54, 127
    %s56 = smul.u32 0, 128
    %v57 = vstv %s56
    %v58 = vadd.s32 %v55, %v57
    %vm59 = vcmp.lt.s32.totalorder %v58, 48
    %v60 = vsel %vm59, %v53, 0.0
    %61 = vst [vmem:[#allocation5] sm:$0x1] %v60
    // Predicated region
    $region10: #{tpu_custom_call.1} parent=1 // pred_check
      _
    $region11: #{tpu_custom_call.1} parent=1 // pred_check_branch
      %63 = sbr.rel (0) target = $region13
    $region12: #{tpu_custom_call.1} parent=1 // pred_region
      %s65 = ssub.s32 16, 16
      %66 = vsyncadd [#allocation4], %s65
      %s68 = sshll.u32 [#allocation5], 4
      %s69 = int_to_ptr.vmem [resolvable:$true] %s68
      %71 = dma.vmem_to_hbm [thread:$0]  %s69, 16, %s1, [#allocation4]
    $region13: #{tpu_custom_call.1} parent=1 // pred_fallthru
      _
    // Predicated region
    $region14: #{tpu_custom_call.1} parent=1 // pred_check
      _
    $region15: #{tpu_custom_call.1} parent=1 // pred_check_branch
      %73 = sbr.rel (0) target = $region17
    $region16: #{tpu_custom_call.1} parent=1 // pred_region
      %74 = dma.done [#allocation4], 16
    $region17: #{tpu_custom_call.1} parent=1 // pred_fallthru
      _
    %75 = vsyncpa [#allocation3], 1
    %76 = vsyncpa [#allocation4], 1

</llo_original>
